<compile_context>
chip_gen: v7x
topology: tpu7x:2x2x1
jax: 0.10.0
libtpu: 0.0.40
codegen_flags: <defaults>
</compile_context>

<pallas_src>
import jax
import jax.numpy as jnp
from jax.experimental import pallas as pl
from jax.experimental.pallas import tpu as pltpu

LAYER_SIZES = [2, 20, 10, 5, 5, 1]
LANE = 128               # lane width: batch tiles are multiples of this
MAX_BATCH_TILE = 8192    # large lane-dense tile; VMEM footprint stays ~1.5 MiB


def _cdiv(a, b):
    return -(-a // b)


def _round_up(a, b):
    return _cdiv(a, b) * b


def mlp_kernel(x_ref,
               w1_ref, b1_ref,
               w2_ref, b2_ref,
               w3_ref, b3_ref,
               w4_ref, b4_ref,
               w5_ref, b5_ref,
               out_ref):
    # Every intermediate is (features, batch_tile): batch on the 128-lane axis.
    # Dots: bf16 operands, f32 accumulation.  Bias add + tanh in f32 (v5e-safe).
    bf16 = jnp.bfloat16
    xT = x_ref[...]                                                              # (2,  TB) bf16
    h = jnp.tanh(jnp.dot(w1_ref[...], xT,
                         preferred_element_type=jnp.float32) + b1_ref[...])      # (20, TB) f32
    h = jnp.tanh(jnp.dot(w2_ref[...], h.astype(bf16),
                         preferred_element_type=jnp.float32) + b2_ref[...])      # (10, TB)
    h = jnp.tanh(jnp.dot(w3_ref[...], h.astype(bf16),
                         preferred_element_type=jnp.float32) + b3_ref[...])      # (5,  TB)
    h = jnp.tanh(jnp.dot(w4_ref[...], h.astype(bf16),
                         preferred_element_type=jnp.float32) + b4_ref[...])      # (5,  TB)
    yT = jnp.dot(w5_ref[...], h.astype(bf16),
                 preferred_element_type=jnp.float32) + b5_ref[...]               # (1,  TB)
    out_ref[...] = yT.astype(out_ref.dtype)


def init_params(key):
    """PyTorch-compatible init: weight (out, in) ~ N(0, 0.1), bias = 0 (kept 2-D)."""
    params = []
    for fan_in, fan_out in zip(LAYER_SIZES[:-1], LAYER_SIZES[1:]):
        key, sub = jax.random.split(key)
        w = (0.1 * jax.random.normal(sub, (fan_out, fan_in))).astype(jnp.float32)
        b = jnp.zeros((fan_out, 1), dtype=jnp.float32)
        params.append((w, b))
    return params


def _pick_tiling(batch):
    """Lane-aligned batch tiling: big tiles, >=2 grid steps when possible (v7x
    megacore), and padding waste bounded by <128 columns per tile."""
    padded_lane = _round_up(batch, LANE)
    n_tiles = _cdiv(padded_lane, MAX_BATCH_TILE)
    if padded_lane >= 2 * LANE:
        n_tiles = max(n_tiles, 2)          # let both v7x TensorCores get work
    tb = _round_up(_cdiv(padded_lane, n_tiles), LANE)
    padded = n_tiles * tb
    return padded, tb, n_tiles


def neural_network_fine(x, params):
    batch = x.shape[0]
    in_features = LAYER_SIZES[0]
    out_features = LAYER_SIZES[-1]

    padded, tb, n_tiles = _pick_tiling(batch)

    # Single pad+transpose (no zeros+update-slice): cast to bf16 first so the
    # wrapper-side HBM pass over the input is half-width.
    xT = jnp.pad(x.astype(jnp.bfloat16).T, ((0, 0), (0, padded - batch)))

    flat_args = [xT]
    in_specs = [pl.BlockSpec((in_features, tb), lambda i: (0, i))]
    for w, b in params:
        # Full-array blocks with constant index maps: weights + biases are
        # VMEM-resident across all batch-grid steps (no re-DMA per step).
        w_bf16 = w.astype(jnp.bfloat16)          # cast once, wrapper-side
        b_f32 = b.astype(jnp.float32)
        in_specs.append(pl.BlockSpec(w_bf16.shape, lambda i: (0, 0)))
        in_specs.append(pl.BlockSpec(b_f32.shape, lambda i: (0, 0)))
        flat_args += [w_bf16, b_f32]

    out_specs = pl.BlockSpec((out_features, tb), lambda i: (0, i))

    macs = sum(a * b for a, b in zip(LAYER_SIZES[:-1], LAYER_SIZES[1:]))
    n_tanh = sum(LAYER_SIZES[1:-1])
    param_bytes = sum(w.size * 2 + b.size * 4 for w, b in params)
    cost = pl.CostEstimate(
        flops=2 * macs * padded,
        transcendentals=n_tanh * padded,
        bytes_accessed=2 * padded * in_features + 4 * padded * out_features + param_bytes,
    )

    outT = pl.pallas_call(
        mlp_kernel,
        out_shape=jax.ShapeDtypeStruct((out_features, padded), jnp.float32),
        grid=(n_tiles,),
        in_specs=in_specs,
        out_specs=out_specs,
        compiler_params=pltpu.CompilerParams(
            dimension_semantics=("parallel",)),   # shards batch tiles across TCs on v7x
        cost_estimate=cost,
    )(*flat_args)

    # Drop batch padding and return row-major (batch, 1) like PyTorch.
    return outT[:, :batch].T


def reference_forward(x, params):
    """Pure f32 reference matching the PyTorch module."""
    h = x.astype(jnp.float32)
    for i, (w, b) in enumerate(params):
        h = h @ w.T + b.T
        if i < len(params) - 1:
            h = jnp.tanh(h)
    return h


if __name__ == "__main__":
    key = jax.random.PRNGKey(0)
    pkey, xkey = jax.random.split(key)

    params = init_params(pkey)
    x = jax.random.normal(xkey, (8, 2), dtype=jnp.float32)  # batch=8, in_features=2

    logits = neural_network_fine(x, params)
    logits = jax.block_until_ready(logits)

    ref = reference_forward(x, params)
    assert logits.shape == (8, 1), logits.shape
    # Kernel uses bf16 MXU operands (f32 accumulation); tolerance loosened
    # accordingly vs. the pure-f32 reference.
    assert jnp.allclose(logits, ref, atol=1e-2, rtol=5e-2), (logits, ref)

    print("KERNEL_OK")
</pallas_src>

<mosaic_0001>
module attributes {stable_mosaic.version = 11 : i64} {
  func.func @mlp_kernel(%arg0: i32, %arg1: memref<2x128xbf16, #tpu.memory_space<vmem>>, %arg2: memref<20x2xbf16, #tpu.memory_space<vmem>>, %arg3: memref<20x1xf32, #tpu.memory_space<vmem>>, %arg4: memref<10x20xbf16, #tpu.memory_space<vmem>>, %arg5: memref<10x1xf32, #tpu.memory_space<vmem>>, %arg6: memref<5x10xbf16, #tpu.memory_space<vmem>>, %arg7: memref<5x1xf32, #tpu.memory_space<vmem>>, %arg8: memref<5x5xbf16, #tpu.memory_space<vmem>>, %arg9: memref<5x1xf32, #tpu.memory_space<vmem>>, %arg10: memref<1x5xbf16, #tpu.memory_space<vmem>>, %arg11: memref<1x1xf32, #tpu.memory_space<vmem>>, %arg12: memref<1x128xf32, #tpu.memory_space<vmem>>) attributes {dimension_semantics = [#tpu.dimension_semantics<parallel>], iteration_bounds = array<i64: 1>, scalar_prefetch = 0 : i64, scratch_operands = 0 : i64, tpu.core_type = #tpu.core_type<tc>, window_params = [{transform_indices = @transform_0, window_bounds = array<i64: 2, 128>}, {pipeline_mode = #tpu.pipeline_mode<synchronous>, transform_indices = @transform_1, window_bounds = array<i64: 20, 2>}, {pipeline_mode = #tpu.pipeline_mode<synchronous>, transform_indices = @transform_2, window_bounds = array<i64: 20, 1>}, {pipeline_mode = #tpu.pipeline_mode<synchronous>, transform_indices = @transform_3, window_bounds = array<i64: 10, 20>}, {pipeline_mode = #tpu.pipeline_mode<synchronous>, transform_indices = @transform_4, window_bounds = array<i64: 10, 1>}, {pipeline_mode = #tpu.pipeline_mode<synchronous>, transform_indices = @transform_5, window_bounds = array<i64: 5, 10>}, {pipeline_mode = #tpu.pipeline_mode<synchronous>, transform_indices = @transform_6, window_bounds = array<i64: 5, 1>}, {pipeline_mode = #tpu.pipeline_mode<synchronous>, transform_indices = @transform_7, window_bounds = array<i64: 5, 5>}, {pipeline_mode = #tpu.pipeline_mode<synchronous>, transform_indices = @transform_8, window_bounds = array<i64: 5, 1>}, {pipeline_mode = #tpu.pipeline_mode<synchronous>, transform_indices = @transform_9, window_bounds = array<i64: 1, 5>}, {pipeline_mode = #tpu.pipeline_mode<synchronous>, transform_indices = @transform_10, window_bounds = array<i64: 1, 1>}, {transform_indices = @transform_11, window_bounds = array<i64: 1, 128>}]} {
    %c0 = arith.constant 0 : index
    %c0_0 = arith.constant 0 : index
    %0 = vector.load %arg1[%c0, %c0_0] : memref<2x128xbf16, #tpu.memory_space<vmem>>, vector<2x128xbf16>
    %c0_1 = arith.constant 0 : index
    %c0_2 = arith.constant 0 : index
    %1 = vector.load %arg2[%c0_1, %c0_2] : memref<20x2xbf16, #tpu.memory_space<vmem>>, vector<20x2xbf16>
    %cst = arith.constant dense<0.000000e+00> : vector<20x128xf32>
    %2 = tpu.matmul %1, %0, %cst {dimension_numbers = #tpu.dot_dimension_numbers<[1], [0], [0], [1], [0, 0, 1, 1], [], []>} : vector<20x2xbf16>, vector<2x128xbf16>, vector<20x128xf32> -> vector<20x128xf32>
    %c0_3 = arith.constant 0 : index
    %c0_4 = arith.constant 0 : index
    %3 = vector.load %arg3[%c0_3, %c0_4] : memref<20x1xf32, #tpu.memory_space<vmem>>, vector<20x1xf32>
    %4 = vector.broadcast %3 : vector<20x1xf32> to vector<20x128xf32>
    %5 = arith.addf %2, %4 : vector<20x128xf32>
    %6 = math.tanh %5 : vector<20x128xf32>
    %c0_5 = arith.constant 0 : index
    %c0_6 = arith.constant 0 : index
    %7 = vector.load %arg4[%c0_5, %c0_6] : memref<10x20xbf16, #tpu.memory_space<vmem>>, vector<10x20xbf16>
    %8 = arith.truncf %6 : vector<20x128xf32> to vector<20x128xbf16>
    %cst_7 = arith.constant dense<0.000000e+00> : vector<10x128xf32>
    %9 = tpu.matmul %7, %8, %cst_7 {dimension_numbers = #tpu.dot_dimension_numbers<[1], [0], [0], [1], [0, 0, 1, 1], [], []>} : vector<10x20xbf16>, vector<20x128xbf16>, vector<10x128xf32> -> vector<10x128xf32>
    %c0_8 = arith.constant 0 : index
    %c0_9 = arith.constant 0 : index
    %10 = vector.load %arg5[%c0_8, %c0_9] : memref<10x1xf32, #tpu.memory_space<vmem>>, vector<10x1xf32>
    %11 = vector.broadcast %10 : vector<10x1xf32> to vector<10x128xf32>
    %12 = arith.addf %9, %11 : vector<10x128xf32>
    %13 = math.tanh %12 : vector<10x128xf32>
    %c0_10 = arith.constant 0 : index
    %c0_11 = arith.constant 0 : index
    %14 = vector.load %arg6[%c0_10, %c0_11] : memref<5x10xbf16, #tpu.memory_space<vmem>>, vector<5x10xbf16>
    %15 = arith.truncf %13 : vector<10x128xf32> to vector<10x128xbf16>
    %cst_12 = arith.constant dense<0.000000e+00> : vector<5x128xf32>
    %16 = tpu.matmul %14, %15, %cst_12 {dimension_numbers = #tpu.dot_dimension_numbers<[1], [0], [0], [1], [0, 0, 1, 1], [], []>} : vector<5x10xbf16>, vector<10x128xbf16>, vector<5x128xf32> -> vector<5x128xf32>
    %c0_13 = arith.constant 0 : index
    %c0_14 = arith.constant 0 : index
    %17 = vector.load %arg7[%c0_13, %c0_14] : memref<5x1xf32, #tpu.memory_space<vmem>>, vector<5x1xf32>
    %18 = vector.broadcast %17 : vector<5x1xf32> to vector<5x128xf32>
    %19 = arith.addf %16, %18 : vector<5x128xf32>
    %20 = math.tanh %19 : vector<5x128xf32>
    %c0_15 = arith.constant 0 : index
    %c0_16 = arith.constant 0 : index
    %21 = vector.load %arg8[%c0_15, %c0_16] : memref<5x5xbf16, #tpu.memory_space<vmem>>, vector<5x5xbf16>
    %22 = arith.truncf %20 : vector<5x128xf32> to vector<5x128xbf16>
    %cst_17 = arith.constant dense<0.000000e+00> : vector<5x128xf32>
    %23 = tpu.matmul %21, %22, %cst_17 {dimension_numbers = #tpu.dot_dimension_numbers<[1], [0], [0], [1], [0, 0, 1, 1], [], []>} : vector<5x5xbf16>, vector<5x128xbf16>, vector<5x128xf32> -> vector<5x128xf32>
    %c0_18 = arith.constant 0 : index
    %c0_19 = arith.constant 0 : index
    %24 = vector.load %arg9[%c0_18, %c0_19] : memref<5x1xf32, #tpu.memory_space<vmem>>, vector<5x1xf32>
    %25 = vector.broadcast %24 : vector<5x1xf32> to vector<5x128xf32>
    %26 = arith.addf %23, %25 : vector<5x128xf32>
    %27 = math.tanh %26 : vector<5x128xf32>
    %c0_20 = arith.constant 0 : index
    %c0_21 = arith.constant 0 : index
    %28 = vector.load %arg10[%c0_20, %c0_21] : memref<1x5xbf16, #tpu.memory_space<vmem>>, vector<1x5xbf16>
    %29 = arith.truncf %27 : vector<5x128xf32> to vector<5x128xbf16>
    %cst_22 = arith.constant dense<0.000000e+00> : vector<1x128xf32>
    %30 = tpu.matmul %28, %29, %cst_22 {dimension_numbers = #tpu.dot_dimension_numbers<[1], [0], [0], [1], [0, 0, 1, 1], [], []>} : vector<1x5xbf16>, vector<5x128xbf16>, vector<1x128xf32> -> vector<1x128xf32>
    %c0_23 = arith.constant 0 : index
    %c0_24 = arith.constant 0 : index
    %31 = vector.load %arg11[%c0_23, %c0_24] : memref<1x1xf32, #tpu.memory_space<vmem>>, vector<1x1xf32>
    %32 = vector.broadcast %31 : vector<1x1xf32> to vector<1x128xf32>
    %33 = arith.addf %30, %32 : vector<1x128xf32>
    %c0_25 = arith.constant 0 : index
    %c0_26 = arith.constant 0 : index
    %34 = vector.load %arg12[%c0_25, %c0_26] : memref<1x128xf32, #tpu.memory_space<vmem>>, vector<1x128xf32>
    tpu.vector_store %arg12[%c0_25, %c0_26], %33 {strides = array<i32>} : memref<1x128xf32, #tpu.memory_space<vmem>>, vector<1x128xf32>,
    return
  }
  func.func @transform_0(%arg0: i32) -> (i32, i32) {
    %c0_i32 = arith.constant 0 : i32
    %c0_i32_0 = arith.constant 0 : i32
    return %c0_i32, %arg0 : i32, i32
  }
  func.func @transform_1(%arg0: i32) -> (i32, i32) {
    %c0_i32 = arith.constant 0 : i32
    %c0_i32_0 = arith.constant 0 : i32
    %c0_i32_1 = arith.constant 0 : i32
    return %c0_i32, %c0_i32_0 : i32, i32
  }
  func.func @transform_2(%arg0: i32) -> (i32, i32) {
    %c0_i32 = arith.constant 0 : i32
    %c0_i32_0 = arith.constant 0 : i32
    %c0_i32_1 = arith.constant 0 : i32
    return %c0_i32, %c0_i32_0 : i32, i32
  }
  func.func @transform_3(%arg0: i32) -> (i32, i32) {
    %c0_i32 = arith.constant 0 : i32
    %c0_i32_0 = arith.constant 0 : i32
    %c0_i32_1 = arith.constant 0 : i32
    return %c0_i32, %c0_i32_0 : i32, i32
  }
  func.func @transform_4(%arg0: i32) -> (i32, i32) {
    %c0_i32 = arith.constant 0 : i32
    %c0_i32_0 = arith.constant 0 : i32
    %c0_i32_1 = arith.constant 0 : i32
    return %c0_i32, %c0_i32_0 : i32, i32
  }
  func.func @transform_5(%arg0: i32) -> (i32, i32) {
    %c0_i32 = arith.constant 0 : i32
    %c0_i32_0 = arith.constant 0 : i32
    %c0_i32_1 = arith.constant 0 : i32
    return %c0_i32, %c0_i32_0 : i32, i32
  }
  func.func @transform_6(%arg0: i32) -> (i32, i32) {
    %c0_i32 = arith.constant 0 : i32
    %c0_i32_0 = arith.constant 0 : i32
    %c0_i32_1 = arith.constant 0 : i32
    return %c0_i32, %c0_i32_0 : i32, i32
  }
  func.func @transform_7(%arg0: i32) -> (i32, i32) {
    %c0_i32 = arith.constant 0 : i32
    %c0_i32_0 = arith.constant 0 : i32
    %c0_i32_1 = arith.constant 0 : i32
    return %c0_i32, %c0_i32_0 : i32, i32
  }
  func.func @transform_8(%arg0: i32) -> (i32, i32) {
    %c0_i32 = arith.constant 0 : i32
    %c0_i32_0 = arith.constant 0 : i32
    %c0_i32_1 = arith.constant 0 : i32
    return %c0_i32, %c0_i32_0 : i32, i32
  }
  func.func @transform_9(%arg0: i32) -> (i32, i32) {
    %c0_i32 = arith.constant 0 : i32
    %c0_i32_0 = arith.constant 0 : i32
    %c0_i32_1 = arith.constant 0 : i32
    return %c0_i32, %c0_i32_0 : i32, i32
  }
  func.func @transform_10(%arg0: i32) -> (i32, i32) {
    %c0_i32 = arith.constant 0 : i32
    %c0_i32_0 = arith.constant 0 : i32
    %c0_i32_1 = arith.constant 0 : i32
    return %c0_i32, %c0_i32_0 : i32, i32
  }
  func.func @transform_11(%arg0: i32) -> (i32, i32) {
    %c0_i32 = arith.constant 0 : i32
    %c0_i32_0 = arith.constant 0 : i32
    return %c0_i32, %arg0 : i32, i32
  }
}

</mosaic_0001>

<llo_original>
// kernel: tpu_custom_call.1
$region0: #{tpu_custom_call.1}
  #allocation0 [shape = 'u32[]', space=smem, size = 0x4, offset = 0x4, fixed_abs, tag = 'smem constant byte address 0x4 - core index']
  #allocation1 [shape = 'u32[144,128]{1,0:T(1,128)}', space=vmem, size = 0x12000, scoped, tag = 'internal scratch']
  #allocation2 [shape = 'f32[1,1]{1,0:T(1,128)S(1)}', space=vmem, size = 0x200, scoped, tag = 'scoped memory for tpu_custom_call.1']
  %s0 = inlined_call_operand.vmem [shape: bf16[2,128], index: 0, kind: input, shape index: {}]
  %s1 = inlined_call_operand.vmem [shape: bf16[20,2], index: 1, kind: input, shape index: {}]
  %s2 = inlined_call_operand.vmem [shape: f32[20,1], index: 2, kind: input, shape index: {}]
  %s3 = inlined_call_operand.vmem [shape: bf16[10,20], index: 3, kind: input, shape index: {}]
  %s4 = inlined_call_operand.vmem [shape: f32[10,1], index: 4, kind: input, shape index: {}]
  %s5 = inlined_call_operand.vmem [shape: bf16[5,10], index: 5, kind: input, shape index: {}]
  %s6 = inlined_call_operand.vmem [shape: f32[5,1], index: 6, kind: input, shape index: {}]
  %s7 = inlined_call_operand.vmem [shape: bf16[5,5], index: 7, kind: input, shape index: {}]
  %s8 = inlined_call_operand.vmem [shape: f32[5,1], index: 8, kind: input, shape index: {}]
  %s9 = inlined_call_operand.vmem [shape: bf16[1,5], index: 9, kind: input, shape index: {}]
  %s10 = inlined_call_operand.<no memory space> [shape: f32[1,1], index: 10, kind: input, shape index: {}]
  %s11 = inlined_call_operand.hbm [shape: f32[1,128], index: 11, kind: output, shape index: {}]
  %s12 = sld [smem:[#allocation0]]
  $region54: #{tpu_custom_call.1} parent=0
    _
  %s14 = ssub.s32 1, %s12
  %s15 = scalar_select 0, %s14, %s12
  %v16 = vstv %s10
  %17 = vst [vmem:[#allocation2] sm:$0x1] %v16
  $region1: #{tpu_custom_call.1} parent=0
    #allocation3 [shape = 'u8[512]{0}', space=vmem, size = 0x400, scoped, tag = 'output window, operand 0, single buffered']
    #allocation4 [shape = 's32[1]{0}', space=sflag, size = 0x4, scoped, tag = 'scoped memory for tpu_custom_call.1']
    %18 = vsyncpa [#allocation4], 0
    // Predicated region
    $region2: #{tpu_custom_call.1} parent=1 // pred_check
      _
    $region3: #{tpu_custom_call.1} parent=1 // pred_check_branch
      %20 = sbr.rel (0) target = $region5
    $region4: #{tpu_custom_call.1} parent=1 // pred_region
      _
    $region5: #{tpu_custom_call.1} parent=1 // pred_fallthru
      _
    // Predicated region
    $region6: #{tpu_custom_call.1} parent=1 // pred_check
      _
    $region7: #{tpu_custom_call.1} parent=1 // pred_check_branch
      %22 = sbr.rel (0) target = $region9
    $region8: #{tpu_custom_call.1} parent=1 // pred_region
      _
    $region9: #{tpu_custom_call.1} parent=1 // pred_fallthru
      _
    // Predicated region
    $region10: #{tpu_custom_call.1} parent=1 // pred_check
      _
    $region11: #{tpu_custom_call.1} parent=1 // pred_check_branch
      %24 = sbr.rel (0) target = $region13
    $region12: #{tpu_custom_call.1} parent=1 // pred_region
      _
    $region13: #{tpu_custom_call.1} parent=1 // pred_fallthru
      _
    // Predicated region
    $region14: #{tpu_custom_call.1} parent=1 // pred_check
      _
    $region15: #{tpu_custom_call.1} parent=1 // pred_check_branch
      %26 = sbr.rel (0) target = $region17
    $region16: #{tpu_custom_call.1} parent=1 // pred_region
      _
    $region17: #{tpu_custom_call.1} parent=1 // pred_fallthru
      _
    // Predicated region
    $region18: #{tpu_custom_call.1} parent=1 // pred_check
      _
    $region19: #{tpu_custom_call.1} parent=1 // pred_check_branch
      %28 = sbr.rel (0) target = $region21
    $region20: #{tpu_custom_call.1} parent=1 // pred_region
      _
    $region21: #{tpu_custom_call.1} parent=1 // pred_fallthru
      _
    // Predicated region
    $region22: #{tpu_custom_call.1} parent=1 // pred_check
      _
    $region23: #{tpu_custom_call.1} parent=1 // pred_check_branch
      %30 = sbr.rel (0) target = $region25
    $region24: #{tpu_custom_call.1} parent=1 // pred_region
      _
    $region25: #{tpu_custom_call.1} parent=1 // pred_fallthru
      _
    // Predicated region
    $region26: #{tpu_custom_call.1} parent=1 // pred_check
      _
    $region27: #{tpu_custom_call.1} parent=1 // pred_check_branch
      %32 = sbr.rel (0) target = $region29
    $region28: #{tpu_custom_call.1} parent=1 // pred_region
      _
    $region29: #{tpu_custom_call.1} parent=1 // pred_fallthru
      _
    // Predicated region
    $region30: #{tpu_custom_call.1} parent=1 // pred_check
      _
    $region31: #{tpu_custom_call.1} parent=1 // pred_check_branch
      %34 = sbr.rel (0) target = $region33
    $region32: #{tpu_custom_call.1} parent=1 // pred_region
      _
    $region33: #{tpu_custom_call.1} parent=1 // pred_fallthru
      _
    // Predicated region
    $region34: #{tpu_custom_call.1} parent=1 // pred_check
      _
    $region35: #{tpu_custom_call.1} parent=1 // pred_check_branch
      %36 = sbr.rel (0) target = $region37
    $region36: #{tpu_custom_call.1} parent=1 // pred_region
      _
    $region37: #{tpu_custom_call.1} parent=1 // pred_fallthru
      _
    // Predicated region
    $region38: #{tpu_custom_call.1} parent=1 // pred_check
      _
    $region39: #{tpu_custom_call.1} parent=1 // pred_check_branch
      %38 = sbr.rel (0) target = $region41
    $region40: #{tpu_custom_call.1} parent=1 // pred_region
      _
    $region41: #{tpu_custom_call.1} parent=1 // pred_fallthru
      _
    // Predicated region
    $region42: #{tpu_custom_call.1} parent=1 // pred_check
      _
    $region43: #{tpu_custom_call.1} parent=1 // pred_check_branch
      %40 = sbr.rel (0) target = $region45
    $region44: #{tpu_custom_call.1} parent=1 // pred_region
      _
    $region45: #{tpu_custom_call.1} parent=1 // pred_fallthru
      _
    %v42 = vld [vmem:[%s0] sm:$0x1]
    %v43 = vld [vmem:[%s1] sm:$0xf]
    %v44 = vld [vmem:[%s1 + $0x4] sm:$0xf]
    %v45 = vld [vmem:[%s1 + $0x8] sm:$0x3]
    %v46 = vld [vmem:[%s2] sm:$0xff]
    %v47 = vld [vmem:[%s2 + $0x8] sm:$0xff]
    %v48 = vld [vmem:[%s2 + $0x10] sm:$0xf]
    %50 = vset.pattern.permute.xlu0 0
    %51 = vperm.xlu0 %50, %v46
    %v52 = vpop.permute.xlu0 %51
    %55 = vset.pattern.permute.xlu0 0
    %56 = vperm.xlu0 %55, %v47
    %v57 = vpop.permute.xlu0 %56
    %60 = vset.pattern.permute.xlu0 0
    %61 = vperm.xlu0 %60, %v48
    %v62 = vpop.permute.xlu0 %61
    %v67 = vunpack.c.l.b16 %v43
    %v68 = vunpack.c.l.b16 %v44
    %v69 = vunpack.c.l.b16 %v45
    %v70 = vpack.c.b16 %v68, %v67
    %v71 = vpack.c.b16 %v69, %v69
    %vm72 = vcmask 15360
    %v74 = vsel %vm72, %v70, 0
    %v77 = vsel %vm72, %v71, 0
    %vm79 = vcmask 1040384
    %v81 = vsel %vm79, %v42, 0
    %83 = vmatprep.subr.bf16.mxu0 0
    %84 = vmatpush1.bf16.msra.mxu0 %v81
    %85 = vmatprep.subr.bf16.mxu0 0
    %86 = vmatpush1.bf16.msra.mxu0 0
    %87 = vmatprep.subr.bf16.mxu0 0
    %88 = vmatpush1.bf16.msra.mxu0 0
    %89 = vmatprep.subr.bf16.mxu0 0
    %90 = vmatpush1.bf16.msra.mxu0 0
    %91 = vmatprep.subr.bf16.mxu0 0
    %92 = vmatpush1.bf16.msra.mxu0 0
    %93 = vmatprep.subr.bf16.mxu0 0
    %94 = vmatpush1.bf16.msra.mxu0 0
    %95 = vmatprep.subr.bf16.mxu0 0
    %96 = vmatpush1.bf16.msra.mxu0 0
    %97 = vmatprep.subr.bf16.mxu0 0
    %98 = vmatpush1.bf16.msra.mxu0 0
    %99 = vmatprep.subr.bf16.mxu0 0
    %100 = vmatpush1.bf16.msra.mxu0 0
    %101 = vmatprep.subr.bf16.mxu0 0
    %102 = vmatpush1.bf16.msra.mxu0 0
    %103 = vmatprep.subr.bf16.mxu0 0
    %104 = vmatpush1.bf16.msra.mxu0 0
    %105 = vmatprep.subr.bf16.mxu0 0
    %106 = vmatpush1.bf16.msra.mxu0 0
    %107 = vmatprep.subr.bf16.mxu0 0
    %108 = vmatpush1.bf16.msra.mxu0 0
    %109 = vmatprep.subr.bf16.mxu0 0
    %110 = vmatpush1.bf16.msra.mxu0 0
    %111 = vmatprep.subr.bf16.mxu0 0
    %112 = vmatpush1.bf16.msra.mxu0 0
    %113 = vmatprep.subr.bf16.mxu0 0
    %114 = vmatpush1.bf16.msra.mxu0 0
    %115 = vmatprep.mubr.bf16.mxu0 0
    %116 = vmatmul.mubr.bf16.gmra.mrb[0].mxu0 %v74
    %v117 = vpop.f32.mrb[0].mxu0
    %v118 = vadd.f32 %v52, %v117
    %v119 = vpop.f32.mrb[0].mxu0
    %v120 = vpop.f32.mrb[0].mxu0
    %v121 = vadd.f32 %v57, %v120
    %v122 = vpop.f32.mrb[0].mxu0
    %123 = vmatprep.mubr.bf16.mxu0 0
    %124 = vmatmul.mubr.bf16.gmra.mrb[0].mxu0 %v77
    %v125 = vpop.f32.mrb[0].mxu0
    %v126 = vadd.f32 %v62, %v125
    %v127 = vpop.f32.mrb[0].mxu0
    %v128 = vpop.f32.mrb[0].mxu0
    %v129 = vpop.f32.mrb[0].mxu0
    %130 = vdwg.mxu0
    %v131 = vtanh.pop %v118
    %v132 = vtanh.pop %v121
    %v133 = vtanh.pop %v126
    %v134 = vld [vmem:[%s3] sm:$0xf]
    %v135 = vld [vmem:[%s3 + $0x4] sm:$0x1]
    %v136 = vpack.c.bf16 %v132, %v131
    %v137 = vpack.c.bf16 %v133, %v133
    %v138 = vld [vmem:[%s4] sm:$0xff]
    %v139 = vld [vmem:[%s4 + $0x8] sm:$0x3]
    %141 = vset.pattern.permute.xlu0 0
    %142 = vperm.xlu0 %141, %v138
    %v143 = vpop.permute.xlu0 %142
    %146 = vset.pattern.permute.xlu0 0
    %147 = vperm.xlu0 %146, %v139
    %v148 = vpop.permute.xlu0 %147
    %v152 = vunpack.c.l.b16 %v134
    %v153 = vunpack.c.l.b16 %v135
    %v154 = vpack.c.b16 %v153, %v152
    %vm155 = vcmask 162816
    %v157 = vsel %vm155, %v154, 0
    %vm159 = vcmask 1041408
    %v161 = vsel %vm159, %v137, 0
    %163 = vmatprep.subr.bf16.mxu0 0
    %164 = vmatpush1.bf16.msra.mxu0 %v136
    %165 = vmatprep.subr.bf16.mxu0 0
    %166 = vmatpush1.bf16.msra.mxu0 %v161
    %167 = vmatprep.subr.bf16.mxu0 0
    %168 = vmatpush1.bf16.msra.mxu0 0
    %169 = vmatprep.subr.bf16.mxu0 0
    %170 = vmatpush1.bf16.msra.mxu0 0
    %171 = vmatprep.subr.bf16.mxu0 0
    %172 = vmatpush1.bf16.msra.mxu0 0
    %173 = vmatprep.subr.bf16.mxu0 0
    %174 = vmatpush1.bf16.msra.mxu0 0
    %175 = vmatprep.subr.bf16.mxu0 0
    %176 = vmatpush1.bf16.msra.mxu0 0
    %177 = vmatprep.subr.bf16.mxu0 0
    %178 = vmatpush1.bf16.msra.mxu0 0
    %179 = vmatprep.subr.bf16.mxu0 0
    %180 = vmatpush1.bf16.msra.mxu0 0
    %181 = vmatprep.subr.bf16.mxu0 0
    %182 = vmatpush1.bf16.msra.mxu0 0
    %183 = vmatprep.subr.bf16.mxu0 0
    %184 = vmatpush1.bf16.msra.mxu0 0
    %185 = vmatprep.subr.bf16.mxu0 0
    %186 = vmatpush1.bf16.msra.mxu0 0
    %187 = vmatprep.subr.bf16.mxu0 0
    %188 = vmatpush1.bf16.msra.mxu0 0
    %189 = vmatprep.subr.bf16.mxu0 0
    %190 = vmatpush1.bf16.msra.mxu0 0
    %191 = vmatprep.subr.bf16.mxu0 0
    %192 = vmatpush1.bf16.msra.mxu0 0
    %193 = vmatprep.subr.bf16.mxu0 0
    %194 = vmatpush1.bf16.msra.mxu0 0
    %195 = vmatprep.mubr.bf16.mxu0 0
    %196 = vmatmul.mubr.bf16.gmra.mrb[0].mxu0 %v157
    %v197 = vpop.f32.mrb[0].mxu0
    %v198 = vadd.f32 %v143, %v197
    %v199 = vpop.f32.mrb[0].mxu0
    %v200 = vpop.f32.mrb[0].mxu0
    %v201 = vadd.f32 %v148, %v200
    %v202 = vpop.f32.mrb[0].mxu0
    %203 = vdwg.mxu0
    %v204 = vtanh.pop %v198
    %v205 = vtanh.pop %v201
    %v206 = vld [vmem:[%s5] sm:$0x7]
    %v207 = vpack.c.bf16 %v205, %v204
    %v208 = vld [vmem:[%s6] sm:$0x1f]
    %210 = vset.pattern.permute.xlu0 0
    %211 = vperm.xlu0 %210, %v208
    %v212 = vpop.permute.xlu0 %211
    %vm214 = vcmask 80896
    %v216 = vsel %vm214, %v206, 0
    %vm218 = vcmask 1044480
    %v220 = vsel %vm218, %v207, 0
    %222 = vmatprep.subr.bf16.mxu0 0
    %223 = vmatpush1.bf16.msra.mxu0 %v220
    %224 = vmatprep.subr.bf16.mxu0 0
    %225 = vmatpush1.bf16.msra.mxu0 0
    %226 = vmatprep.subr.bf16.mxu0 0
    %227 = vmatpush1.bf16.msra.mxu0 0
    %228 = vmatprep.subr.bf16.mxu0 0
    %229 = vmatpush1.bf16.msra.mxu0 0
    %230 = vmatprep.subr.bf16.mxu0 0
    %231 = vmatpush1.bf16.msra.mxu0 0
    %232 = vmatprep.subr.bf16.mxu0 0
    %233 = vmatpush1.bf16.msra.mxu0 0
    %234 = vmatprep.subr.bf16.mxu0 0
    %235 = vmatpush1.bf16.msra.mxu0 0
    %236 = vmatprep.subr.bf16.mxu0 0
    %237 = vmatpush1.bf16.msra.mxu0 0
    %238 = vmatprep.subr.bf16.mxu0 0
    %239 = vmatpush1.bf16.msra.mxu0 0
    %240 = vmatprep.subr.bf16.mxu0 0
    %241 = vmatpush1.bf16.msra.mxu0 0
    %242 = vmatprep.subr.bf16.mxu0 0
    %243 = vmatpush1.bf16.msra.mxu0 0
    %244 = vmatprep.subr.bf16.mxu0 0
    %245 = vmatpush1.bf16.msra.mxu0 0
    %246 = vmatprep.subr.bf16.mxu0 0
    %247 = vmatpush1.bf16.msra.mxu0 0
    %248 = vmatprep.subr.bf16.mxu0 0
    %249 = vmatpush1.bf16.msra.mxu0 0
    %250 = vmatprep.subr.bf16.mxu0 0
    %251 = vmatpush1.bf16.msra.mxu0 0
    %252 = vmatprep.subr.bf16.mxu0 0
    %253 = vmatpush1.bf16.msra.mxu0 0
    %254 = vmatprep.mubr.bf16.mxu0 0
    %255 = vmatmul.mubr.bf16.gmra.mrb[0].mxu0 %v216
    %v256 = vpop.f32.mrb[0].mxu0
    %v257 = vadd.f32 %v212, %v256
    %v258 = vpop.f32.mrb[0].mxu0
    %v259 = vpop.f32.mrb[0].mxu0
    %v260 = vpop.f32.mrb[0].mxu0
    %261 = vdwg.mxu0
    %v262 = vtanh.pop %v257
    %v263 = vld [vmem:[%s7] sm:$0x7]
    %v264 = vpack.c.bf16 %v262, %v262
    %v265 = vld [vmem:[%s8] sm:$0x1f]
    %267 = vset.pattern.permute.xlu0 0
    %268 = vperm.xlu0 %267, %v265
    %v269 = vpop.permute.xlu0 %268
    %vm271 = vcmask 39936
    %v273 = vsel %vm271, %v263, 0
    %vm275 = vcmask 1042432
    %v276 = vsel %vm159, 4294967295, 65535
    %v277 = vsel %vm275, %v276, 0
    %v279 = vand.u32 %v264, %v277
    %281 = vmatprep.subr.bf16.mxu0 0
    %282 = vmatpush1.bf16.msra.mxu0 %v279
    %283 = vmatprep.subr.bf16.mxu0 0
    %284 = vmatpush1.bf16.msra.mxu0 0
    %285 = vmatprep.subr.bf16.mxu0 0
    %286 = vmatpush1.bf16.msra.mxu0 0
    %287 = vmatprep.subr.bf16.mxu0 0
    %288 = vmatpush1.bf16.msra.mxu0 0
    %289 = vmatprep.subr.bf16.mxu0 0
    %290 = vmatpush1.bf16.msra.mxu0 0
    %291 = vmatprep.subr.bf16.mxu0 0
    %292 = vmatpush1.bf16.msra.mxu0 0
    %293 = vmatprep.subr.bf16.mxu0 0
    %294 = vmatpush1.bf16.msra.mxu0 0
    %295 = vmatprep.subr.bf16.mxu0 0
    %296 = vmatpush1.bf16.msra.mxu0 0
    %297 = vmatprep.subr.bf16.mxu0 0
    %298 = vmatpush1.bf16.msra.mxu0 0
    %299 = vmatprep.subr.bf16.mxu0 0
    %300 = vmatpush1.bf16.msra.mxu0 0
    %301 = vmatprep.subr.bf16.mxu0 0
    %302 = vmatpush1.bf16.msra.mxu0 0
    %303 = vmatprep.subr.bf16.mxu0 0
    %304 = vmatpush1.bf16.msra.mxu0 0
    %305 = vmatprep.subr.bf16.mxu0 0
    %306 = vmatpush1.bf16.msra.mxu0 0
    %307 = vmatprep.subr.bf16.mxu0 0
    %308 = vmatpush1.bf16.msra.mxu0 0
    %309 = vmatprep.subr.bf16.mxu0 0
    %310 = vmatpush1.bf16.msra.mxu0 0
    %311 = vmatprep.subr.bf16.mxu0 0
    %312 = vmatpush1.bf16.msra.mxu0 0
    %313 = vmatprep.mubr.bf16.mxu0 0
    %314 = vmatmul.mubr.bf16.gmra.mrb[0].mxu0 %v273
    %v315 = vpop.f32.mrb[0].mxu0
    %v316 = vadd.f32 %v269, %v315
    %v317 = vpop.f32.mrb[0].mxu0
    %v318 = vpop.f32.mrb[0].mxu0
    %v319 = vpop.f32.mrb[0].mxu0
    %320 = vdwg.mxu0
    %v321 = vtanh.pop %v316
    %v322 = vld [vmem:[%s9] sm:$0x1]
    %v323 = vpack.c.bf16 %v321, %v321
    %v324 = vld [vmem:[#allocation2] sm:$0x1]
    %326 = vset.pattern.permute.xlu0 0
    %327 = vperm.xlu0 %326, %v324
    %v328 = vpop.permute.xlu0 %327
    %v330 = vlaneseq
    %v331 = vshrl.u32 %v330, 7
    %v332 = vsub.s32 0, %v331
    %v333 = vrot.slane %v328, %v332
    %v335 = vsel %vm271, %v322, 0
    %v338 = vand.u32 %v323, %v277
    %340 = vmatprep.subr.bf16.mxu0 0
    %341 = vmatpush1.bf16.msra.mxu0 %v338
    %342 = vmatprep.subr.bf16.mxu0 0
    %343 = vmatpush1.bf16.msra.mxu0 0
    %344 = vmatprep.subr.bf16.mxu0 0
    %345 = vmatpush1.bf16.msra.mxu0 0
    %346 = vmatprep.subr.bf16.mxu0 0
    %347 = vmatpush1.bf16.msra.mxu0 0
    %348 = vmatprep.subr.bf16.mxu0 0
    %349 = vmatpush1.bf16.msra.mxu0 0
    %350 = vmatprep.subr.bf16.mxu0 0
    %351 = vmatpush1.bf16.msra.mxu0 0
    %352 = vmatprep.subr.bf16.mxu0 0
    %353 = vmatpush1.bf16.msra.mxu0 0
    %354 = vmatprep.subr.bf16.mxu0 0
    %355 = vmatpush1.bf16.msra.mxu0 0
    %356 = vmatprep.subr.bf16.mxu0 0
    %357 = vmatpush1.bf16.msra.mxu0 0
    %358 = vmatprep.subr.bf16.mxu0 0
    %359 = vmatpush1.bf16.msra.mxu0 0
    %360 = vmatprep.subr.bf16.mxu0 0
    %361 = vmatpush1.bf16.msra.mxu0 0
    %362 = vmatprep.subr.bf16.mxu0 0
    %363 = vmatpush1.bf16.msra.mxu0 0
    %364 = vmatprep.subr.bf16.mxu0 0
    %365 = vmatpush1.bf16.msra.mxu0 0
    %366 = vmatprep.subr.bf16.mxu0 0
    %367 = vmatpush1.bf16.msra.mxu0 0
    %368 = vmatprep.subr.bf16.mxu0 0
    %369 = vmatpush1.bf16.msra.mxu0 0
    %370 = vmatprep.subr.bf16.mxu0 0
    %371 = vmatpush1.bf16.msra.mxu0 0
    %372 = vmatprep.mubr.bf16.mxu0 0
    %373 = vmatmul.mubr.bf16.gmra.mrb[0].mxu0 %v335
    %v374 = vpop.f32.mrb[0].mxu0
    %v375 = vadd.f32 %v333, %v374
    %v376 = vpop.f32.mrb[0].mxu0
    %v377 = vpop.f32.mrb[0].mxu0
    %v378 = vpop.f32.mrb[0].mxu0
    %379 = vdwg.mxu0
    %380 = vst [vmem:[#allocation3] sm:$0x1] %v375
    // Predicated region
    $region46: #{tpu_custom_call.1} parent=1 // pred_check
      _
    $region47: #{tpu_custom_call.1} parent=1 // pred_check_branch
      %382 = sbr.rel (0) target = $region49
    $region48: #{tpu_custom_call.1} parent=1 // pred_region
      %s384 = ssub.s32 16, 16
      %385 = vsyncadd [#allocation4], %s384
      %s387 = sshll.u32 [#allocation3], 4
      %s388 = int_to_ptr.vmem [resolvable:$true] %s387
      %390 = dma.vmem_to_hbm [thread:$0]  %s388, 16, %s11, [#allocation4]
    $region49: #{tpu_custom_call.1} parent=1 // pred_fallthru
      _
    // Predicated region
    $region50: #{tpu_custom_call.1} parent=1 // pred_check
      _
    $region51: #{tpu_custom_call.1} parent=1 // pred_check_branch
      %392 = sbr.rel (0) target = $region53
    $region52: #{tpu_custom_call.1} parent=1 // pred_region
      %393 = dma.done [#allocation4], 16
    $region53: #{tpu_custom_call.1} parent=1 // pred_fallthru
      _
    %394 = vsyncpa [#allocation4], 1

</llo_original>
